<compile_context>
chip_gen: v7x
topology: tpu7x:2x2x1
jax: 0.10.0
libtpu: 0.0.40
codegen_flags: <defaults>
</compile_context>

<pallas_src>
import functools
import math

import jax
import jax.numpy as jnp
from jax import lax
from jax.experimental import pallas as pl
from jax.experimental.pallas import tpu as pltpu


def _spiking_conv1d_kernel(x_ref, w_ref, b_ref, beta_ref,        # inputs
                           spk_out_ref, loss_ref,                # outputs
                           mem_ref, spk_ref, inp_ref, lsum_ref,  # scratch
                           *, K, C_in, dilation, stride, nb_steps,
                           lateral_connections, eps):
    ci = pl.program_id(1)                       # time-chunk index  (arbitrary)
    nc = pl.num_programs(1)
    B_TILE, C_out = mem_ref.shape
    T_CHUNK = inp_ref.shape[0] // B_TILE

    # ---- per-batch-tile state init at the first time chunk ----
    @pl.when(ci == 0)
    def _():
        mem_ref[...] = jnp.zeros_like(mem_ref)
        spk_ref[...] = jnp.zeros_like(spk_ref)
        lsum_ref[...] = jnp.zeros_like(lsum_ref)

    # ---- parameter-derived terms; hoisted out of the per-step loop ----
    w = w_ref[...]                                        # (K*C_in, C_out)
    wf = w.astype(jnp.float32)
    norm = jnp.sum(wf * wf, axis=0, keepdims=True)        # (1, C_out) = (w**2).sum
    inv_norm = jnp.broadcast_to(1.0 / (norm + eps), (B_TILE, C_out))
    b_row = b_ref[...]                                    # (1, C_out)
    b_full = jnp.broadcast_to(b_row, (B_TILE, C_out))
    beta_row = beta_ref[...]                              # (1, C_out) broadcast beta
    beta_full = jnp.broadcast_to(beta_row, (B_TILE, C_out))
    if lateral_connections:
        # d = einsum('abc,ebc->ae', w, w): single dot_general on the flat weight.
        d = lax.dot_general(w, w, (((0,), (0,)), ((), ())),
                            preferred_element_type=jnp.float32)   # (C_out, C_out)
        bn_full = None
    else:
        d = None
        bn_full = jnp.broadcast_to(b_row * norm, (B_TILE, C_out))  # b * norm

    # ---- conv1d hoisted out of the recurrence: one big matmul per tap ----
    acc = None
    if stride == 1:
        # x block: (1, 1, CHUNK_ROWS*B_TILE, C_in), rows ordered (time_row, batch).
        for k in range(K):                                # K small: static unroll
            lo = k * dilation * B_TILE
            xk = x_ref[0, 0, lo:lo + T_CHUNK * B_TILE]    # (T_CHUNK*B_TILE, C_in)
            wk = w[k * C_in:(k + 1) * C_in]               # (C_in, C_out)
            part = jnp.dot(xk, wk, preferred_element_type=jnp.float32)
            acc = part if acc is None else acc + part
    else:
        # TODO(synk): stride>1 fallback relies on an in-kernel (T,B,C)->(T*B,C)
        # reshape; not exercised by the demo (module default stride=1).
        x3 = x_ref[0, 0]                                  # (CHUNK_ROWS, B_TILE, C_in)
        for k in range(K):
            hi = k * dilation + (T_CHUNK - 1) * stride + 1
            xk = x3[k * dilation:hi:stride].reshape(T_CHUNK * B_TILE, C_in)
            wk = w[k * C_in:(k + 1) * C_in]
            part = jnp.dot(xk, wk, preferred_element_type=jnp.float32)
            acc = part if acc is None else acc + part

    # Pre-scale the whole chunk by (1 - beta) once (hoisted out of the loop).
    inp_ref[...] = acc * (1.0 - beta_row)                 # (T_CHUNK*B_TILE, C_out)

    # ---- LIF recurrence over this chunk (VPU + one tiny MXU op per step) ----
    nb_valid = nb_steps - ci * T_CHUNK      # steps of this chunk that are real

    def step(t, carry):
        spk = spk_ref[...]                                # (B_TILE, C_out) f32
        if lateral_connections:
            rst = jnp.dot(spk, d, preferred_element_type=jnp.float32)
        else:
            rst = spk * bn_full                           # einsum('ab,b->ab', spk, b*norm)
        start = pl.multiple_of(t * B_TILE, B_TILE)
        inp = inp_ref[pl.ds(start, B_TILE)]               # already * (1 - beta)
        # TODO(synk): recurrent=True path (input_ += spk @ self.v) not implemented.
        mem = (mem_ref[...] - rst) * beta_full + inp
        mthr = mem * inv_norm - b_full
        new_spk = (mthr > 0.0).astype(jnp.float32)        # surrogate-heaviside fwd
        mem_ref[...] = mem
        spk_ref[...] = new_spk
        spk_out_ref[0, t] = new_spk.astype(spk_out_ref.dtype)
        # Fused loss: spikes are {0,1} so spk**2 == spk; mask padded tail steps.
        valid = (t < nb_valid).astype(jnp.float32)
        lsum_ref[...] += new_spk * valid
        return carry

    lax.fori_loop(0, T_CHUNK, step, 0)

    # ---- write this batch tile's loss partial after its last time chunk ----
    @pl.when(ci == nc - 1)
    def _():
        loss_ref[...] = jnp.sum(lsum_ref[...]).reshape(1, 1, 1)


def spiking_conv1d_forward(x, w, b, beta, *, dilation=1, stride=1, eps=1e-8,
                           lateral_connections=True, recurrent=False,
                           flatten_output=False, t_chunk=128,
                           compute_dtype=jnp.float32,
                           spike_dtype=jnp.bfloat16,
                           vmem_limit_bytes=None):
    """x: (B, C_in, T) like PyTorch NCW. Returns (output, loss)."""
    if recurrent:
        # TODO(synk): recurrent path (spk @ v added to the input) not implemented.
        raise NotImplementedError("recurrent=True not supported")

    B, C_in, T = x.shape
    C_out, _, K = w.shape
    pad = int(math.ceil((K - 1) * dilation / 2))
    T_pad = T + 2 * pad
    H = (K - 1) * dilation
    nb_steps = (T_pad - H - 1) // stride + 1

    t_chunk = max(1, min(t_chunk, nb_steps))
    nc = pl.cdiv(nb_steps, t_chunk)                  # number of time chunks
    CR = t_chunk * stride + H                        # padded-x rows needed / chunk

    # Batch tiling: the batch axis is a 'parallel' grid axis (v7x: 2 TensorCores).
    if B > 8 and B % 8 == 0:
        B_TILE = min(B, 64)
        while B % B_TILE:
            B_TILE -= 8
    else:
        B_TILE = B                                   # small batch: one full tile
    nbt = B // B_TILE

    # --- time-major padded input with enough zero tail for a partial last chunk ---
    rows_needed = (nc - 1) * t_chunk * stride + CR
    x_t = jnp.transpose(x, (2, 0, 1)).astype(jnp.float32)          # (T, B, C_in)
    x_t = jnp.pad(x_t, ((pad, rows_needed - T - pad), (0, 0), (0, 0)))
    # Per-chunk windows incl. the (K-1)*dilation halo (tiny duplication per chunk).
    starts = jnp.arange(nc, dtype=jnp.int32) * (t_chunk * stride)
    idx = starts[:, None] + jnp.arange(CR, dtype=jnp.int32)[None, :]
    x_g = x_t[idx]                                                 # (nc, CR, B, C_in)
    x_g = x_g.reshape(nc, CR, nbt, B_TILE, C_in).transpose(0, 2, 1, 3, 4)
    if stride == 1:
        # merge (time_row, batch) in the wrapper -> no in-kernel reshape needed
        x_kernel = x_g.reshape(nc, nbt, CR * B_TILE, C_in).astype(compute_dtype)
        x_spec = pl.BlockSpec((1, 1, CR * B_TILE, C_in),
                              lambda bi, ci: (ci, bi, 0, 0))
    else:
        x_kernel = x_g.astype(compute_dtype)                       # (nc,nbt,CR,Bt,Cin)
        x_spec = pl.BlockSpec((1, 1, CR, B_TILE, C_in),
                              lambda bi, ci: (ci, bi, 0, 0, 0))

    w_flat = (jnp.transpose(w, (2, 1, 0)).reshape(K * C_in, C_out)
              .astype(compute_dtype))                              # (K*C_in, C_out)
    b2 = b.reshape(1, C_out).astype(jnp.float32)
    beta_row = jnp.broadcast_to(jnp.asarray(beta, jnp.float32).reshape(1, 1),
                                (1, C_out))

    kernel = functools.partial(_spiking_conv1d_kernel, K=K, C_in=C_in,
                               dilation=dilation, stride=stride,
                               nb_steps=nb_steps,
                               lateral_connections=lateral_connections,
                               eps=float(eps))

    spk_chunks, loss_parts = pl.pallas_call(
        kernel,
        grid=(nbt, nc),
        in_specs=[
            x_spec,
            pl.BlockSpec((K * C_in, C_out), lambda bi, ci: (0, 0)),   # w (resident)
            pl.BlockSpec((1, C_out), lambda bi, ci: (0, 0)),          # b
            pl.BlockSpec((1, C_out), lambda bi, ci: (0, 0)),          # beta
        ],
        out_specs=(
            pl.BlockSpec((1, t_chunk, B_TILE, C_out),
                         lambda bi, ci: (ci, 0, bi, 0)),              # spikes / chunk
            pl.BlockSpec((1, 1, 1), lambda bi, ci: (bi, 0, 0)),       # loss partial
        ),
        out_shape=(
            jax.ShapeDtypeStruct((nc, t_chunk, B, C_out), spike_dtype),
            jax.ShapeDtypeStruct((nbt, 1, 1), jnp.float32),
        ),
        scratch_shapes=[
            pltpu.VMEM((B_TILE, C_out), jnp.float32),                 # mem
            pltpu.VMEM((B_TILE, C_out), jnp.float32),                 # spk
            pltpu.VMEM((t_chunk * B_TILE, C_out), jnp.float32),       # (1-beta)*conv
            pltpu.VMEM((B_TILE, C_out), jnp.float32),                 # running loss
        ],
        compiler_params=pltpu.CompilerParams(
            dimension_semantics=("parallel", "arbitrary"),
            vmem_limit_bytes=vmem_limit_bytes),
    )(x_kernel, w_flat, b2, beta_row)

    spk_rec = spk_chunks.reshape(nc * t_chunk, B, C_out)[:nb_steps]
    spk_rec = spk_rec.astype(x.dtype)                    # spikes are exactly 0/1
    loss = 0.5 * jnp.sum(loss_parts) / float(nb_steps * B * C_out)
    if flatten_output:
        output = jnp.transpose(spk_rec, (1, 0, 2))       # (B, nb_steps, C_out)
    else:
        output = jnp.transpose(spk_rec, (1, 2, 0))       # (B, C_out, nb_steps)
    # TODO(synk): spk_rec_hist host-side numpy caching is a side effect, omitted.
    return output, loss


def _reference_forward(x, w, b, beta, *, dilation=1, stride=1, eps=1e-8):
    """Pure-JAX reference mirroring the PyTorch forward (lateral, non-recurrent)."""
    B, C_in, T = x.shape
    C_out, _, K = w.shape
    pad = int(math.ceil((K - 1) * dilation / 2))
    conv = lax.conv_general_dilated(x, w, (stride,), [(pad, pad)],
                                    rhs_dilation=(dilation,),
                                    dimension_numbers=('NCH', 'OIH', 'NCH'))
    d = jnp.einsum('abc,ebc->ae', w, w)
    norm = (w ** 2).sum((1, 2))

    def step(carry, inp):
        mem, spk = carry
        rst = spk @ d
        mem = (mem - rst) * beta + inp * (1.0 - beta)
        mthr = mem / (norm + eps) - b
        spk = (mthr > 0).astype(x.dtype)
        return (mem, spk), spk

    conv_t = jnp.transpose(conv, (2, 0, 1))
    init = (jnp.zeros((B, C_out), x.dtype), jnp.zeros((B, C_out), x.dtype))
    _, spk_seq = lax.scan(step, init, conv_t)
    spk_rec = jnp.transpose(spk_seq, (1, 2, 0))
    return spk_rec, 0.5 * jnp.mean(spk_rec ** 2)


if __name__ == "__main__":
    # Small shapes consistent with the module's forward.
    B, C_in, C_out, T, K = 2, 4, 8, 16, 3
    dilation, stride = 1, 1
    w_init_mean, w_init_std = 0.0, 4.0

    key = jax.random.PRNGKey(0)
    k_w, k_beta, k_b, k_x = jax.random.split(key, 4)

    # reset_parameters() + clamp(), done deterministically in-script.
    w = (w_init_mean + w_init_std * math.sqrt(1.0 / (C_in * K))
         * jax.random.normal(k_w, (C_out, C_in, K), jnp.float32))
    beta = jnp.clip(0.7 + 0.01 * jax.random.normal(k_beta, (), jnp.float32), 0.0, 1.0)
    b = jnp.maximum(1.0 + 0.01 * jax.random.normal(k_b, (C_out,), jnp.float32), 0.0)
    x = jax.random.normal(k_x, (B, C_in, T), jnp.float32)

    nb_steps = (T + 2 * 1 - dilation * (K - 1) - 1) // stride + 1

    # f32 compute path; small t_chunk so the demo exercises multi-chunk state
    # carry and the masked partial final chunk. Strict check vs. reference.
    out, loss = spiking_conv1d_forward(x, w, b, beta, dilation=dilation,
                                       stride=stride, eps=1e-8,
                                       lateral_connections=True,
                                       flatten_output=False,
                                       t_chunk=6,
                                       compute_dtype=jnp.float32)
    out = jax.block_until_ready(out)
    loss = jax.block_until_ready(loss)

    ref_out, ref_loss = _reference_forward(x, w, b, beta, dilation=dilation,
                                           stride=stride, eps=1e-8)
    assert out.shape == (B, C_out, nb_steps)
    assert jnp.allclose(out, ref_out, atol=1e-5), "spk_rec mismatch vs reference"
    assert jnp.allclose(loss, ref_loss, atol=1e-6), "loss mismatch vs reference"

    # bf16 matmul-input path (production setting per the perf review). Spikes are
    # still exactly {0,1}; near-threshold spikes may flip vs. the f32 reference,
    # so only structural checks here.
    out_bf, loss_bf = spiking_conv1d_forward(x, w, b, beta, dilation=dilation,
                                             stride=stride, eps=1e-8,
                                             lateral_connections=True,
                                             flatten_output=False,
                                             t_chunk=7,
                                             compute_dtype=jnp.bfloat16)
    out_bf = jax.block_until_ready(out_bf)
    loss_bf = jax.block_until_ready(loss_bf)
    assert out_bf.shape == (B, C_out, nb_steps)
    assert bool(jnp.all((out_bf == 0) | (out_bf == 1)))
    assert bool(jnp.isfinite(loss_bf))

    print("KERNEL_OK")
</pallas_src>

<mosaic_0001>
module attributes {stable_mosaic.version = 11 : i64} {
  func.func @_spiking_conv1d_kernel(%arg0: i32, %arg1: i32, %arg2: memref<1x1x16x4xf32, #tpu.memory_space<vmem>>, %arg3: memref<12x8xf32, #tpu.memory_space<vmem>>, %arg4: memref<1x8xf32, #tpu.memory_space<vmem>>, %arg5: memref<1x8xf32, #tpu.memory_space<vmem>>, %arg6: memref<1x6x2x8xbf16, #tpu.memory_space<vmem>>, %arg7: memref<1x1x1xf32, #tpu.memory_space<vmem>>, %arg8: memref<2x8xf32, #tpu.memory_space<vmem>>, %arg9: memref<2x8xf32, #tpu.memory_space<vmem>>, %arg10: memref<12x8xf32, #tpu.memory_space<vmem>>, %arg11: memref<2x8xf32, #tpu.memory_space<vmem>>) attributes {dimension_semantics = [#tpu.dimension_semantics<parallel>, #tpu.dimension_semantics<arbitrary>], iteration_bounds = array<i64: 1, 3>, scalar_prefetch = 0 : i64, scratch_operands = 4 : i64, tpu.core_type = #tpu.core_type<tc>, window_params = [{transform_indices = @transform_0, window_bounds = array<i64: 1, 1, 16, 4>}, {pipeline_mode = #tpu.pipeline_mode<synchronous>, transform_indices = @transform_1, window_bounds = array<i64: 12, 8>}, {pipeline_mode = #tpu.pipeline_mode<synchronous>, transform_indices = @transform_2, window_bounds = array<i64: 1, 8>}, {pipeline_mode = #tpu.pipeline_mode<synchronous>, transform_indices = @transform_3, window_bounds = array<i64: 1, 8>}, {transform_indices = @transform_4, window_bounds = array<i64: 1, 6, 2, 8>}, {transform_indices = @transform_5, window_bounds = array<i64: 1, 1, 1>}]} {
    %c0_i32 = arith.constant 0 : i32
    %0 = arith.cmpi eq, %arg1, %c0_i32 : i32
    %1 = arith.extui %0 : i1 to i32
    %c0_i32_0 = arith.constant 0 : i32
    %2 = arith.cmpi ne, %1, %c0_i32_0 : i32
    scf.if %2 {
      %cst_29 = arith.constant 0.000000e+00 : f32
      %45 = vector.broadcast %cst_29 : f32 to vector<2x8xf32>
      %c0_30 = arith.constant 0 : index
      %c0_31 = arith.constant 0 : index
      %46 = vector.load %arg8[%c0_30, %c0_31] : memref<2x8xf32, #tpu.memory_space<vmem>>, vector<2x8xf32>
      tpu.vector_store %arg8[%c0_30, %c0_31], %45 {strides = array<i32>} : memref<2x8xf32, #tpu.memory_space<vmem>>, vector<2x8xf32>,
      %cst_32 = arith.constant 0.000000e+00 : f32
      %47 = vector.broadcast %cst_32 : f32 to vector<2x8xf32>
      %c0_33 = arith.constant 0 : index
      %c0_34 = arith.constant 0 : index
      %48 = vector.load %arg9[%c0_33, %c0_34] : memref<2x8xf32, #tpu.memory_space<vmem>>, vector<2x8xf32>
      tpu.vector_store %arg9[%c0_33, %c0_34], %47 {strides = array<i32>} : memref<2x8xf32, #tpu.memory_space<vmem>>, vector<2x8xf32>,
      %cst_35 = arith.constant 0.000000e+00 : f32
      %49 = vector.broadcast %cst_35 : f32 to vector<2x8xf32>
      %c0_36 = arith.constant 0 : index
      %c0_37 = arith.constant 0 : index
      %50 = vector.load %arg11[%c0_36, %c0_37] : memref<2x8xf32, #tpu.memory_space<vmem>>, vector<2x8xf32>
      tpu.vector_store %arg11[%c0_36, %c0_37], %49 {strides = array<i32>} : memref<2x8xf32, #tpu.memory_space<vmem>>, vector<2x8xf32>,
    } else {
    }
    %c0 = arith.constant 0 : index
    %c0_1 = arith.constant 0 : index
    %3 = vector.load %arg3[%c0, %c0_1] : memref<12x8xf32, #tpu.memory_space<vmem>>, vector<12x8xf32>
    %4 = arith.mulf %3, %3 : vector<12x8xf32>
    %cst = arith.constant dense<0.000000e+00> : vector<8xf32>
    %5 = vector.multi_reduction <add>, %4, %cst [0] : vector<12x8xf32> to vector<8xf32>
    %6 = vector.shape_cast %5 : vector<8xf32> to vector<1x8xf32>
    %cst_2 = arith.constant 9.99999993E-9 : f32
    %7 = vector.broadcast %cst_2 : f32 to vector<1x8xf32>
    %8 = arith.addf %6, %7 : vector<1x8xf32>
    %cst_3 = arith.constant 1.000000e+00 : f32
    %9 = vector.broadcast %cst_3 : f32 to vector<1x8xf32>
    %10 = arith.divf %9, %8 : vector<1x8xf32>
    %11 = vector.shape_cast %10 : vector<1x8xf32> to vector<1x8xf32>
    %12 = vector.broadcast %11 : vector<1x8xf32> to vector<2x8xf32>
    %c0_4 = arith.constant 0 : index
    %c0_5 = arith.constant 0 : index
    %13 = vector.load %arg4[%c0_4, %c0_5] : memref<1x8xf32, #tpu.memory_space<vmem>>, vector<1x8xf32>
    %14 = vector.shape_cast %13 : vector<1x8xf32> to vector<1x8xf32>
    %15 = vector.broadcast %14 : vector<1x8xf32> to vector<2x8xf32>
    %c0_6 = arith.constant 0 : index
    %c0_7 = arith.constant 0 : index
    %16 = vector.load %arg5[%c0_6, %c0_7] : memref<1x8xf32, #tpu.memory_space<vmem>>, vector<1x8xf32>
    %17 = vector.shape_cast %16 : vector<1x8xf32> to vector<1x8xf32>
    %18 = vector.broadcast %17 : vector<1x8xf32> to vector<2x8xf32>
    %cst_8 = arith.constant dense<0.000000e+00> : vector<8x8xf32>
    %19 = tpu.matmul %3, %3, %cst_8 {dimension_numbers = #tpu.dot_dimension_numbers<[0], [0], [1], [1], [0, 1, 1, 1], [], []>} : vector<12x8xf32>, vector<12x8xf32>, vector<8x8xf32> -> vector<8x8xf32>
    %c0_9 = arith.constant 0 : index
    %c0_10 = arith.constant 0 : index
    %c0_11 = arith.constant 0 : index
    %c0_12 = arith.constant 0 : index
    %20 = vector.load %arg2[%c0_9, %c0_10, %c0_11, %c0_12] : memref<1x1x16x4xf32, #tpu.memory_space<vmem>>, vector<1x1x12x4xf32>
    %21 = vector.shape_cast %20 : vector<1x1x12x4xf32> to vector<12x4xf32>
    %22 = vector.extract_strided_slice %3 {offsets = [0, 0], sizes = [4, 8], strides = [1, 1]} : vector<12x8xf32> to vector<4x8xf32>
    %cst_13 = arith.constant dense<0.000000e+00> : vector<12x8xf32>
    %23 = tpu.matmul %21, %22, %cst_13 {dimension_numbers = #tpu.dot_dimension_numbers<[1], [0], [0], [1], [0, 0, 1, 1], [], []>} : vector<12x4xf32>, vector<4x8xf32>, vector<12x8xf32> -> vector<12x8xf32>
    %c0_14 = arith.constant 0 : index
    %c0_15 = arith.constant 0 : index
    %c2 = arith.constant 2 : index
    %c0_16 = arith.constant 0 : index
    %24 = vector.load %arg2[%c0_14, %c0_15, %c2, %c0_16] : memref<1x1x16x4xf32, #tpu.memory_space<vmem>>, vector<1x1x12x4xf32>
    %25 = vector.shape_cast %24 : vector<1x1x12x4xf32> to vector<12x4xf32>
    %26 = vector.extract_strided_slice %3 {offsets = [4, 0], sizes = [4, 8], strides = [1, 1]} : vector<12x8xf32> to vector<4x8xf32>
    %cst_17 = arith.constant dense<0.000000e+00> : vector<12x8xf32>
    %27 = tpu.matmul %25, %26, %cst_17 {dimension_numbers = #tpu.dot_dimension_numbers<[1], [0], [0], [1], [0, 0, 1, 1], [], []>} : vector<12x4xf32>, vector<4x8xf32>, vector<12x8xf32> -> vector<12x8xf32>
    %28 = arith.addf %23, %27 : vector<12x8xf32>
    %c0_18 = arith.constant 0 : index
    %c0_19 = arith.constant 0 : index
    %c4 = arith.constant 4 : index
    %c0_20 = arith.constant 0 : index
    %29 = vector.load %arg2[%c0_18, %c0_19, %c4, %c0_20] : memref<1x1x16x4xf32, #tpu.memory_space<vmem>>, vector<1x1x12x4xf32>
    %30 = vector.shape_cast %29 : vector<1x1x12x4xf32> to vector<12x4xf32>
    %31 = vector.extract_strided_slice %3 {offsets = [8, 0], sizes = [4, 8], strides = [1, 1]} : vector<12x8xf32> to vector<4x8xf32>
    %cst_21 = arith.constant dense<0.000000e+00> : vector<12x8xf32>
    %32 = tpu.matmul %30, %31, %cst_21 {dimension_numbers = #tpu.dot_dimension_numbers<[1], [0], [0], [1], [0, 0, 1, 1], [], []>} : vector<12x4xf32>, vector<4x8xf32>, vector<12x8xf32> -> vector<12x8xf32>
    %33 = arith.addf %28, %32 : vector<12x8xf32>
    %cst_22 = arith.constant 1.000000e+00 : f32
    %34 = vector.broadcast %cst_22 : f32 to vector<1x8xf32>
    %35 = arith.subf %34, %16 : vector<1x8xf32>
    %36 = vector.broadcast %35 : vector<1x8xf32> to vector<12x8xf32>
    %37 = arith.mulf %33, %36 : vector<12x8xf32>
    %c0_23 = arith.constant 0 : index
    %c0_24 = arith.constant 0 : index
    %38 = vector.load %arg10[%c0_23, %c0_24] : memref<12x8xf32, #tpu.memory_space<vmem>>, vector<12x8xf32>
    tpu.vector_store %arg10[%c0_23, %c0_24], %37 {strides = array<i32>} : memref<12x8xf32, #tpu.memory_space<vmem>>, vector<12x8xf32>,
    %c6_i32 = arith.constant 6 : i32
    %39 = arith.muli %arg1, %c6_i32 : i32
    %c16_i32 = arith.constant 16 : i32
    %40 = arith.subi %c16_i32, %39 : i32
    %c0_i32_25 = arith.constant 0 : i32
    %c6_i32_26 = arith.constant 6 : i32
    %41 = arith.addi %c0_i32_25, %c6_i32_26 : i32
    %c1_i32 = arith.constant 1 : i32
    scf.for %arg12 = %c0_i32_25 to %41 step %c1_i32  : i32 {
      %c0_29 = arith.constant 0 : index
      %c0_30 = arith.constant 0 : index
      %45 = vector.load %arg9[%c0_29, %c0_30] : memref<2x8xf32, #tpu.memory_space<vmem>>, vector<2x8xf32>
      %cst_31 = arith.constant dense<0.000000e+00> : vector<2x8xf32>
      %46 = tpu.matmul %45, %19, %cst_31 {dimension_numbers = #tpu.dot_dimension_numbers<[1], [0], [0], [1], [0, 0, 1, 1], [], []>} : vector<2x8xf32>, vector<8x8xf32>, vector<2x8xf32> -> vector<2x8xf32>
      %c2_i32_32 = arith.constant 2 : i32
      %47 = arith.muli %arg12, %c2_i32_32 : i32
      %48 = tpu.assume_multiple %47, 2 : i32
      %49 = arith.index_cast %48 : i32 to index
      %c0_33 = arith.constant 0 : index
      %50 = vector.load %arg10[%49, %c0_33] : memref<12x8xf32, #tpu.memory_space<vmem>>, vector<2x8xf32>
      %c0_34 = arith.constant 0 : index
      %c0_35 = arith.constant 0 : index
      %51 = vector.load %arg8[%c0_34, %c0_35] : memref<2x8xf32, #tpu.memory_space<vmem>>, vector<2x8xf32>
      %52 = arith.subf %51, %46 : vector<2x8xf32>
      %53 = arith.mulf %52, %18 : vector<2x8xf32>
      %54 = arith.addf %53, %50 : vector<2x8xf32>
      %55 = arith.mulf %54, %12 : vector<2x8xf32>
      %56 = arith.subf %55, %15 : vector<2x8xf32>
      %cst_36 = arith.constant 0.000000e+00 : f32
      %57 = vector.broadcast %cst_36 : f32 to vector<2x8xf32>
      %58 = arith.cmpf ogt, %56, %57 : vector<2x8xf32>
      %59 = arith.extui %58 : vector<2x8xi1> to vector<2x8xi32>
      %60 = arith.sitofp %59 : vector<2x8xi32> to vector<2x8xf32>
      %c0_37 = arith.constant 0 : index
      %c0_38 = arith.constant 0 : index
      %61 = vector.load %arg8[%c0_37, %c0_38] : memref<2x8xf32, #tpu.memory_space<vmem>>, vector<2x8xf32>
      tpu.vector_store %arg8[%c0_37, %c0_38], %54 {strides = array<i32>} : memref<2x8xf32, #tpu.memory_space<vmem>>, vector<2x8xf32>,
      %c0_39 = arith.constant 0 : index
      %c0_40 = arith.constant 0 : index
      %62 = vector.load %arg9[%c0_39, %c0_40] : memref<2x8xf32, #tpu.memory_space<vmem>>, vector<2x8xf32>
      tpu.vector_store %arg9[%c0_39, %c0_40], %60 {strides = array<i32>} : memref<2x8xf32, #tpu.memory_space<vmem>>, vector<2x8xf32>,
      %63 = arith.truncf %60 : vector<2x8xf32> to vector<2x8xbf16>
      %c0_41 = arith.constant 0 : index
      %64 = arith.index_cast %arg12 : i32 to index
      %c0_42 = arith.constant 0 : index
      %c0_43 = arith.constant 0 : index
      %65 = vector.load %arg6[%c0_41, %64, %c0_42, %c0_43] : memref<1x6x2x8xbf16, #tpu.memory_space<vmem>>, vector<1x1x2x8xbf16>
      %66 = vector.shape_cast %65 : vector<1x1x2x8xbf16> to vector<2x8xbf16>
      %67 = vector.shape_cast %63 : vector<2x8xbf16> to vector<1x1x2x8xbf16>
      tpu.vector_store %arg6[%c0_41, %64, %c0_42, %c0_43], %67 {strides = array<i32>} : memref<1x6x2x8xbf16, #tpu.memory_space<vmem>>, vector<1x1x2x8xbf16>,
      %68 = arith.cmpi slt, %arg12, %40 : i32
      %69 = arith.extui %68 : i1 to i32
      %70 = arith.sitofp %69 : i32 to f32
      %c0_44 = arith.constant 0 : index
      %c0_45 = arith.constant 0 : index
      %71 = vector.load %arg11[%c0_44, %c0_45] : memref<2x8xf32, #tpu.memory_space<vmem>>, vector<2x8xf32>
      %72 = vector.broadcast %70 : f32 to vector<2x8xf32>
      %73 = arith.mulf %60, %72 : vector<2x8xf32>
      %74 = arith.addf %71, %73 : vector<2x8xf32>
      %c0_46 = arith.constant 0 : index
      %c0_47 = arith.constant 0 : index
      %75 = vector.load %arg11[%c0_46, %c0_47] : memref<2x8xf32, #tpu.memory_space<vmem>>, vector<2x8xf32>
      tpu.vector_store %arg11[%c0_46, %c0_47], %74 {strides = array<i32>} : memref<2x8xf32, #tpu.memory_space<vmem>>, vector<2x8xf32>,
    }
    %c6_i32_27 = arith.constant 6 : i32
    %c2_i32 = arith.constant 2 : i32
    %42 = arith.cmpi eq, %arg1, %c2_i32 : i32
    %43 = arith.extui %42 : i1 to i32
    %c0_i32_28 = arith.constant 0 : i32
    %44 = arith.cmpi ne, %43, %c0_i32_28 : i32
    scf.if %44 {
      %c0_29 = arith.constant 0 : index
      %c0_30 = arith.constant 0 : index
      %45 = vector.load %arg11[%c0_29, %c0_30] : memref<2x8xf32, #tpu.memory_space<vmem>>, vector<2x8xf32>
      %46 = vector.shape_cast %45 : vector<2x8xf32> to vector<1x2x8xf32>
      %cst_31 = arith.constant dense<0.000000e+00> : vector<1xf32>
      %47 = vector.multi_reduction <add>, %46, %cst_31 [1, 2] : vector<1x2x8xf32> to vector<1xf32>
      %48 = vector.shape_cast %47 : vector<1xf32> to vector<1x1x1xf32>
      %49 = vector.extract %48[0, 0, 0] : f32 from vector<1x1x1xf32>
      %50 = vector.broadcast %49 : f32 to vector<1x1x1xf32>
      %c0_32 = arith.constant 0 : index
      %c0_33 = arith.constant 0 : index
      %c0_34 = arith.constant 0 : index
      %51 = vector.load %arg7[%c0_32, %c0_33, %c0_34] : memref<1x1x1xf32, #tpu.memory_space<vmem>>, vector<1x1x1xf32>
      tpu.vector_store %arg7[%c0_32, %c0_33, %c0_34], %50 {strides = array<i32>} : memref<1x1x1xf32, #tpu.memory_space<vmem>>, vector<1x1x1xf32>,
    } else {
    }
    return
  }
  func.func @transform_0(%arg0: i32, %arg1: i32) -> (i32, i32, i32, i32) {
    %c0_i32 = arith.constant 0 : i32
    %c0_i32_0 = arith.constant 0 : i32
    %c0_i32_1 = arith.constant 0 : i32
    return %arg1, %arg0, %c0_i32, %c0_i32_0 : i32, i32, i32, i32
  }
  func.func @transform_1(%arg0: i32, %arg1: i32) -> (i32, i32) {
    %c0_i32 = arith.constant 0 : i32
    %c0_i32_0 = arith.constant 0 : i32
    %c0_i32_1 = arith.constant 0 : i32
    return %c0_i32, %c0_i32_0 : i32, i32
  }
  func.func @transform_2(%arg0: i32, %arg1: i32) -> (i32, i32) {
    %c0_i32 = arith.constant 0 : i32
    %c0_i32_0 = arith.constant 0 : i32
    %c0_i32_1 = arith.constant 0 : i32
    return %c0_i32, %c0_i32_0 : i32, i32
  }
  func.func @transform_3(%arg0: i32, %arg1: i32) -> (i32, i32) {
    %c0_i32 = arith.constant 0 : i32
    %c0_i32_0 = arith.constant 0 : i32
    %c0_i32_1 = arith.constant 0 : i32
    return %c0_i32, %c0_i32_0 : i32, i32
  }
  func.func @transform_4(%arg0: i32, %arg1: i32) -> (i32, i32, i32, i32) {
    %c0_i32 = arith.constant 0 : i32
    %c0_i32_0 = arith.constant 0 : i32
    %c0_i32_1 = arith.constant 0 : i32
    return %arg1, %c0_i32, %arg0, %c0_i32_0 : i32, i32, i32, i32
  }
  func.func @transform_5(%arg0: i32, %arg1: i32) -> (i32, i32, i32) {
    %c0_i32 = arith.constant 0 : i32
    %c0_i32_0 = arith.constant 0 : i32
    %c0_i32_1 = arith.constant 0 : i32
    return %arg0, %c0_i32, %c0_i32_0 : i32, i32, i32
  }
}

</mosaic_0001>

<llo_original>
// kernel: tpu_custom_call.1
$region0: #{tpu_custom_call.1}
  #allocation0 [shape = 'u32[]', space=smem, size = 0x4, offset = 0x4, fixed_abs, tag = 'smem constant byte address 0x4 - core index']
  #allocation1 [shape = 'u32[144,128]{1,0:T(1,128)}', space=vmem, size = 0x12000, scoped, tag = 'internal scratch']
  #allocation2 [shape = 'f32[2,8]{1,0:T(2,128)}', space=vmem, size = 0x400, scoped, tag = 'scratch operand']
  #allocation3 [shape = 'f32[2,8]{1,0:T(2,128)}', space=vmem, size = 0x400, scoped, tag = 'scratch operand']
  #allocation4 [shape = 'f32[12,8]{1,0:T(8,128)}', space=vmem, size = 0x2000, scoped, tag = 'scratch operand']
  #allocation5 [shape = 'f32[2,8]{1,0:T(2,128)}', space=vmem, size = 0x400, scoped, tag = 'scratch operand']
  %s0 = inlined_call_operand.vmem [shape: f32[3,1,16,4], index: 0, kind: input, shape index: {}]
  %s1 = inlined_call_operand.vmem [shape: f32[12,8], index: 1, kind: input, shape index: {}]
  %s2 = inlined_call_operand.vmem [shape: f32[1,8], index: 2, kind: input, shape index: {}]
  %s3 = inlined_call_operand.vmem [shape: f32[1,8], index: 3, kind: input, shape index: {}]
  %s4 = inlined_call_operand.hbm [shape: bf16[3,6,2,8], index: 4, kind: output, shape index: {0}]
  %s5 = inlined_call_operand.hbm [shape: f32[1,1,1], index: 5, kind: output, shape index: {1}]
  %6 = xla_tuple %s4, %s5
  %s7 = sld [smem:[#allocation0]]
  $region72: #{tpu_custom_call.1} parent=0
    _
  %s9 = ssub.s32 1, %s7
  %s10 = scalar_select 0, %s9, %s7
  $region1: #{tpu_custom_call.1} parent=0
    #allocation6 [shape = 'u8[6144]{0}', space=vmem, size = 0x1800, scoped, tag = 'output window, operand 0']
    #allocation7 [shape = 's32[2]{0}', space=sflag, size = 0x8, scoped, tag = 'scoped memory for tpu_custom_call.1']
    #allocation8 [shape = 'u8[512]{0}', space=vmem, size = 0x400, scoped, tag = 'output window, operand 1, single buffered']
    #allocation9 [shape = 's32[1]{0}', space=sflag, size = 0x4, scoped, tag = 'scoped memory for tpu_custom_call.1']
    %11 = vsyncpa [#allocation7], 0
    %s12 = scalar_lea.sflag [#allocation7], 1
    %13 = vsyncpa %s12, 0
    %14 = vsyncpa [#allocation9], 0
    loop: start=0, step=1, limit=5
    $region2: #{tpu_custom_call.1} parent=1 // loop_pre_header
      _
    $region3: #{tpu_custom_call.1} parent=1 // loop_header
      %s16 = sphi 0, %s20
      %p17 = scmp.ge.s32.totalorder %s16, 5
      %s23 = sphi 0, %s35
      %s24 = sphi 0, %s31
      %s25 = sphi 0, %s23
      %s26 = sphi 0, %s24
      %s27 = sphi 0, %s25
      %s28 = sphi 0, %s26
      %s40 = sphi 0, %s42
      %s43 = sphi 0, %s40
      %s44 = sphi 0, %s43
      %s60 = sphi 0, %s44
      %s64 = sphi 0, %s64
      %s66 = sphi 0, %s64
      %s67 = sphi 0, %s66
      %s81 = sphi 0, %s67
      %s85 = sphi 0, %s85
      %s87 = sphi 0, %s85
      %s88 = sphi 0, %s87
      %s102 = sphi 0, %s88
      %s106 = sphi 0, %s106
      %s108 = sphi 0, %s106
      %s109 = sphi 0, %s108
      %s123 = sphi 0, %s109
      %s131 = sphi 0, %s133
      %s134 = sphi 0, %s131
      %s135 = sphi 0, %s134
      %s151 = sphi 0, %s135
      %s157 = sphi 0, %s159
      %s160 = sphi 0, %s157
      %s161 = sphi 0, %s160
      %s177 = sphi 0, %s161
    $region4: #{tpu_custom_call.1} parent=1 // loop_header_branch
      %19 = sbr.rel (%p17) target = $region8
    $region5: #{tpu_custom_call.1} parent=1 // loop_body
      %s21 = ssub.s32 %s16, 1
      %s22 = ssub.s32 %s16, 2
      %s29 = sadd.s32 1, %s24
      %p30 = scmp.ge.s32.totalorder %s29, 3
      %s31 = scalar_select %p30, 0, %s29
      %s32 = sadd.s32 1, %s23
      %s33 = scalar_select %p30, %s32, %s23
      %p34 = scmp.ge.s32.totalorder %s33, 1
      %s35 = scalar_select %p34, 0, %s33
      %s36 = ssub.s32 %s24, %s31
      %s37 = ssub.s32 %s23, %s35
      %s38 = sor.u32 %s36, %s37
      %p39 = scmp.eq.s32.totalorder %s38, 0
      %s41 = sadd.s32 %s40, 1
      %s42 = scalar_select %p39, %s40, %s41
      %p45 = pneg %p39
      %p46 = scmp.eq.s32.totalorder %s16, 2
      %p47 = por %p45, %p46
      %p48 = scmp.ne.s32.totalorder %s40, %s43
      %p49 = scmp.eq.s32.totalorder %s16, 0
      %p50 = por %p48, %p49
      %p51 = scmp.ne.s32.totalorder %s40, %s43
      %p52 = scmp.eq.s32.totalorder %s21, 2
      %p53 = por %p51, %p52
      %p54 = scmp.ne.s32.totalorder %s43, %s44
      %p55 = scmp.eq.s32.totalorder %s21, 0
      %p56 = por %p54, %p55
      %p57 = scmp.ne.s32.totalorder %s43, %s44
      %p58 = scmp.eq.s32.totalorder %s22, 2
      %p59 = por %p57, %p58
      %p61 = scmp.ne.s32.totalorder %s44, %s60
      %p62 = scmp.eq.s32.totalorder %s22, 0
      %p63 = por %p61, %p62
      %s65 = sadd.s32 %s64, 1
      %p68 = scmp.eq.s32.totalorder %s16, 2
      %p69 = scmp.ne.s32.totalorder %s64, %s66
      %p70 = scmp.eq.s32.totalorder %s16, 0
      %p71 = por %p69, %p70
      %p72 = scmp.ne.s32.totalorder %s64, %s66
      %p73 = scmp.eq.s32.totalorder %s21, 2
      %p74 = por %p72, %p73
      %p75 = scmp.ne.s32.totalorder %s66, %s67
      %p76 = scmp.eq.s32.totalorder %s21, 0
      %p77 = por %p75, %p76
      %p78 = scmp.ne.s32.totalorder %s66, %s67
      %p79 = scmp.eq.s32.totalorder %s22, 2
      %p80 = por %p78, %p79
      %p82 = scmp.ne.s32.totalorder %s67, %s81
      %p83 = scmp.eq.s32.totalorder %s22, 0
      %p84 = por %p82, %p83
      %s86 = sadd.s32 %s85, 1
      %p89 = scmp.eq.s32.totalorder %s16, 2
      %p90 = scmp.ne.s32.totalorder %s85, %s87
      %p91 = scmp.eq.s32.totalorder %s16, 0
      %p92 = por %p90, %p91
      %p93 = scmp.ne.s32.totalorder %s85, %s87
      %p94 = scmp.eq.s32.totalorder %s21, 2
      %p95 = por %p93, %p94
      %p96 = scmp.ne.s32.totalorder %s87, %s88
      %p97 = scmp.eq.s32.totalorder %s21, 0
      %p98 = por %p96, %p97
      %p99 = scmp.ne.s32.totalorder %s87, %s88
      %p100 = scmp.eq.s32.totalorder %s22, 2
      %p101 = por %p99, %p100
      %p103 = scmp.ne.s32.totalorder %s88, %s102
      %p104 = scmp.eq.s32.totalorder %s22, 0
      %p105 = por %p103, %p104
      %s107 = sadd.s32 %s106, 1
      %p110 = scmp.eq.s32.totalorder %s16, 2
      %p111 = scmp.ne.s32.totalorder %s106, %s108
      %p112 = scmp.eq.s32.totalorder %s16, 0
      %p113 = por %p111, %p112
      %p114 = scmp.ne.s32.totalorder %s106, %s108
      %p115 = scmp.eq.s32.totalorder %s21, 2
      %p116 = por %p114, %p115
      %p117 = scmp.ne.s32.totalorder %s108, %s109
      %p118 = scmp.eq.s32.totalorder %s21, 0
      %p119 = por %p117, %p118
      %p120 = scmp.ne.s32.totalorder %s108, %s109
      %p121 = scmp.eq.s32.totalorder %s22, 2
      %p122 = por %p120, %p121
      %p124 = scmp.ne.s32.totalorder %s109, %s123
      %p125 = scmp.eq.s32.totalorder %s22, 0
      %p126 = por %p124, %p125
      %s127 = ssub.s32 %s24, %s31
      %s128 = ssub.s32 %s23, %s35
      %s129 = sor.u32 %s127, %s128
      %p130 = scmp.eq.s32.totalorder %s129, 0
      %s132 = sadd.s32 %s131, 1
      %s133 = scalar_select %p130, %s131, %s132
      %p136 = pneg %p130
      %p137 = scmp.eq.s32.totalorder %s16, 2
      %p138 = por %p136, %p137
      %p139 = scmp.ne.s32.totalorder %s131, %s134
      %p140 = scmp.eq.s32.totalorder %s16, 0
      %p141 = por %p139, %p140
      %p142 = scmp.ne.s32.totalorder %s131, %s134
      %p143 = scmp.eq.s32.totalorder %s21, 2
      %p144 = por %p142, %p143
      %p145 = scmp.ne.s32.totalorder %s134, %s135
      %p146 = scmp.eq.s32.totalorder %s21, 0
      %p147 = por %p145, %p146
      %p148 = scmp.ne.s32.totalorder %s134, %s135
      %p149 = scmp.eq.s32.totalorder %s22, 2
      %p150 = por %p148, %p149
      %p152 = scmp.ne.s32.totalorder %s135, %s151
      %p153 = scmp.eq.s32.totalorder %s22, 0
      %p154 = por %p152, %p153
      %s155 = ssub.s32 %s23, %s35
      %p156 = scmp.eq.s32.totalorder %s155, 0
      %s158 = sadd.s32 %s157, 1
      %s159 = scalar_select %p156, %s157, %s158
      %p162 = pneg %p156
      %p163 = scmp.eq.s32.totalorder %s16, 2
      %p164 = por %p162, %p163
      %p165 = scmp.ne.s32.totalorder %s157, %s160
      %p166 = scmp.eq.s32.totalorder %s16, 0
      %p167 = por %p165, %p166
      %p168 = scmp.ne.s32.totalorder %s157, %s160
      %p169 = scmp.eq.s32.totalorder %s21, 2
      %p170 = por %p168, %p169
      %p171 = scmp.ne.s32.totalorder %s160, %s161
      %p172 = scmp.eq.s32.totalorder %s21, 0
      %p173 = por %p171, %p172
      %p174 = scmp.ne.s32.totalorder %s160, %s161
      %p175 = scmp.eq.s32.totalorder %s22, 2
      %p176 = por %p174, %p175
      %p178 = scmp.ne.s32.totalorder %s161, %s177
      %p179 = scmp.eq.s32.totalorder %s22, 0
      %p180 = por %p178, %p179
      %p181 = scmp.le.s32.totalorder 1, %s16
      %p182 = scmp.lt.s32.totalorder %s16, 4
      %p183 = pnand %p181, %p182
      %p184 = pneg %p183
      // Predicated region
      $region9: #{tpu_custom_call.1} parent=5 // pred_check
        _
      $region10: #{tpu_custom_call.1} parent=5 // pred_check_branch
        %186 = sbr.rel (%p183) target = $region12
      $region11: #{tpu_custom_call.1} parent=5 // pred_region
        %s187 = ssub.s32 %s16, 1
        // Predicated region
        $region13: #{tpu_custom_call.1} parent=11 // pred_check
          %p188 = pneg %p77
        $region14: #{tpu_custom_call.1} parent=11 // pred_check_branch
          %190 = sbr.rel (%p188) target = $region16
        $region15: #{tpu_custom_call.1} parent=11 // pred_region
          _
        $region16: #{tpu_custom_call.1} parent=11 // pred_fallthru
          _
        // Predicated region
        $region17: #{tpu_custom_call.1} parent=11 // pred_check
          %p191 = pneg %p98
        $region18: #{tpu_custom_call.1} parent=11 // pred_check_branch
          %193 = sbr.rel (%p191) target = $region20
        $region19: #{tpu_custom_call.1} parent=11 // pred_region
          _
        $region20: #{tpu_custom_call.1} parent=11 // pred_fallthru
          _
        // Predicated region
        $region21: #{tpu_custom_call.1} parent=11 // pred_check
          %p194 = pneg %p119
        $region22: #{tpu_custom_call.1} parent=11 // pred_check_branch
          %196 = sbr.rel (%p194) target = $region24
        $region23: #{tpu_custom_call.1} parent=11 // pred_region
          _
        $region24: #{tpu_custom_call.1} parent=11 // pred_fallthru
          _
      $region12: #{tpu_custom_call.1} parent=5 // pred_fallthru
        _
      %p197 = scmp.lt.s32.totalorder %s16, 3
      // Predicated region
      $region25: #{tpu_custom_call.1} parent=5 // pred_check
        %p198 = pneg %p197
      $region26: #{tpu_custom_call.1} parent=5 // pred_check_branch
        %200 = sbr.rel (%p198) target = $region28
      $region27: #{tpu_custom_call.1} parent=5 // pred_region
        // Predicated region
        $region29: #{tpu_custom_call.1} parent=27 // pred_check
          %p201 = pneg %p50
        $region30: #{tpu_custom_call.1} parent=27 // pred_check_branch
          %203 = sbr.rel (%p201) target = $region32
        $region31: #{tpu_custom_call.1} parent=27 // pred_region
          %p204 = scmp.lt.s32.totalorder %s24, 2
          %s205 = scalar_select %p204, %s24, 2
          %p206 = scmp.lt.s32.totalorder %s23, 0
          %s207 = scalar_select %p206, %s23, 0
          %s208 = smul.addr %s207, 2
          %s209 = smul.addr %s205, 2
          %s210 = sadd.s32 %s208, %s209
          %s211 = smul.addr %s210, 8
          %s212 = scalar_lea.vmem %s0, %s211
        $region32: #{tpu_custom_call.1} parent=27 // pred_fallthru
          _
      $region28: #{tpu_custom_call.1} parent=5 // pred_fallthru
        _
      %p213 = scmp.le.s32.totalorder 1, %s16
      %p214 = scmp.lt.s32.totalorder %s16, 4
      %p215 = pnand %p213, %p214
      %p216 = pneg %p215
      // Predicated region
      $region33: #{tpu_custom_call.1} parent=5 // pred_check
        _
      $region34: #{tpu_custom_call.1} parent=5 // pred_check_branch
        %218 = sbr.rel (%p215) target = $region36
      $region35: #{tpu_custom_call.1} parent=5 // pred_region
        %s219 = ssub.s32 %s16, 1
        %p220 = scmp.lt.s32.totalorder %s26, 2
        %s221 = scalar_select %p220, %s26, 2
        %p222 = scmp.lt.s32.totalorder %s25, 0
        %s223 = scalar_select %p222, %s25, 0
        %s224 = smul.addr %s223, 2
        %s225 = smul.addr %s221, 2
        %s226 = sadd.s32 %s224, %s225
        %s227 = smul.addr %s226, 8
        %s228 = scalar_lea.vmem %s0, %s227
        %p229 = pneg %p56
        %p230 = pneg %p53
        %p231 = pneg %p77
        %p232 = pneg %p74
        %p233 = pneg %p98
        %p234 = pneg %p95
        %p235 = pneg %p119
        %p236 = pneg %p116
        %p237 = pneg %p147
        %p238 = pneg %p144
        %s239 = sand.u32 %s134, 1
        %s240 = scalar_lea.sflag [#allocation7], %s239
        %s241 = sand.u32 %s134, 1
        %s242 = smul.addr %s241, 6
        %s243 = scalar_lea.vmem [#allocation6], %s242
        %p244 = pneg %p173
        %p245 = pneg %p170
        %p246 = scmp.lt.s32.totalorder %s26, 2
        %s247 = scalar_select %p246, %s26, 2
        %p248 = scmp.lt.s32.totalorder %s25, 0
        %s249 = scalar_select %p248, %s25, 0
        %s250 = smul.addr %s249, 2
        %s251 = smul.addr %s247, 2
        %s252 = sadd.s32 %s250, %s251
        %s253 = smul.addr %s252, 8
        %s254 = scalar_lea.vmem %s0, %s253
        %p255 = scmp.eq.s32.totalorder %s26, 0
        // Predicated region
        $region37: #{tpu_custom_call.1} parent=35 // pred_check
          %p256 = pneg %p255
        $region38: #{tpu_custom_call.1} parent=35 // pred_check_branch
          %258 = sbr.rel (%p256) target = $region40
        $region39: #{tpu_custom_call.1} parent=35 // pred_region
          %vm259 = vcmask 58368
          %260 = vst.msk [vmem:[#allocation2] sm:$0x3] %vm259, 0.0
          %261 = vst.msk [vmem:[#allocation3] sm:$0x3] %vm259, 0.0
          %262 = vst.msk [vmem:[#allocation5] sm:$0x3] %vm259, 0.0
        $region40: #{tpu_custom_call.1} parent=35 // pred_fallthru
          _
        %v263 = vld [vmem:[%s1] sm:$0xff]
        %v264 = vld [vmem:[%s1 + $0x8] sm:$0xf]
        %v265 = vmul.f32 %v263, %v263
        %v266 = vmul.f32 %v264, %v264
        %vm267 = vcmask 64512
        %v268 = vsel %vm267, %v265, 0.0
        %vm269 = vcmask 60416
        %v270 = vsel %vm269, %v266, 0.0
        %v271 = vadd.f32 %v268, %v270
        %v272 = vrot.slane %v271, 4
        %v273 = vadd.f32 %v271, %v272
        %v274 = vrot.slane %v273, 2
        %v275 = vadd.f32 %v273, %v274
        %v276 = vrot.slane %v275, 1
        %v277 = vadd.f32 %v275, %v276
        %v278 = vadd.f32 %v277, 1e-08
        %v279 = vrcp.pop %v278
        %v280 = vmul.f32 1.0, %v279
        %v281 = vld [vmem:[%s2] sm:$0x1]
        %v283 = vlaneseq
        %v284 = vshrl.u32 %v283, 7
        %v285 = vsub.s32 0, %v284
        %v286 = vrot.slane %v281, %v285
        %v288 = vld [vmem:[%s3] sm:$0x1]
        %v290 = vlaneseq
        %v291 = vshrl.u32 %v290, 7
        %v292 = vsub.s32 0, %v291
        %v293 = vrot.slane %v288, %v292
        %295 = vxpose.xlu0.b32.start [1/16] %v263, 128
        %296 = vxpose.xlu0.b32.cont [2/16] %v264, 128
        %297 = vxpose.xlu0.b32.cont [3/16] 0.0, 128
        %298 = vxpose.xlu0.b32.cont [4/16] 0.0, 128
        %299 = vxpose.xlu0.b32.cont [5/16] 0.0, 128
        %300 = vxpose.xlu0.b32.cont [6/16] 0.0, 128
        %301 = vxpose.xlu0.b32.cont [7/16] 0.0, 128
        %302 = vxpose.xlu0.b32.cont [8/16] 0.0, 128
        %303 = vxpose.xlu0.b32.cont [9/16] 0.0, 128
        %304 = vxpose.xlu0.b32.cont [10/16] 0.0, 128
        %305 = vxpose.xlu0.b32.cont [11/16] 0.0, 128
        %306 = vxpose.xlu0.b32.cont [12/16] 0.0, 128
        %307 = vxpose.xlu0.b32.cont [13/16] 0.0, 128
        %308 = vxpose.xlu0.b32.cont [14/16] 0.0, 128
        %309 = vxpose.xlu0.b32.cont [15/16] 0.0, 128
        %310 = vxpose.xlu0.b32.end [16/16] 0.0, 128
        %v311 = vpop.trf.xlu0
        %v312 = vpop.trf.xlu0
        %v313 = vpop.trf.xlu0
        %v314 = vpop.trf.xlu0
        %v315 = vpop.trf.xlu0
        %v316 = vpop.trf.xlu0
        %v317 = vpop.trf.xlu0
        %v318 = vpop.trf.xlu0
        %v319 = vpop.trf.xlu0
        %v320 = vpop.trf.xlu0
        %v321 = vpop.trf.xlu0
        %v322 = vpop.trf.xlu0
        %v323 = vpop.trf.xlu0
        %v324 = vpop.trf.xlu0
        %v325 = vpop.trf.xlu0
        %v326 = vpop.trf.xlu0
        %vm327 = vcmask 97280
        %v329 = vsel %vm327, %v311, 0
        %vm331 = vcmask 1043456
        %v333 = vsel %vm331, %v264, 0
        %335 = vmatprep.subr.mxu0 0.0
        %336 = vmatpush1.msra.mxu0 %v263
        %337 = vmatprep.subr.mxu0 0.0
        %338 = vmatpush1.msra.mxu0 %v333
        %339 = vmatprep.subr.mxu0 0.0
        %340 = vmatpush1.msra.mxu0 0.0
        %341 = vmatprep.subr.mxu0 0.0
        %342 = vmatpush1.msra.mxu0 0.0
        %343 = vmatprep.subr.mxu0 0.0
        %344 = vmatpush1.msra.mxu0 0.0
        %345 = vmatprep.subr.mxu0 0.0
        %346 = vmatpush1.msra.mxu0 0.0
        %347 = vmatprep.subr.mxu0 0.0
        %348 = vmatpush1.msra.mxu0 0.0
        %349 = vmatprep.subr.mxu0 0.0
        %350 = vmatpush1.msra.mxu0 0.0
        %351 = vmatprep.subr.mxu0 0.0
        %352 = vmatpush1.msra.mxu0 0.0
        %353 = vmatprep.subr.mxu0 0.0
        %354 = vmatpush1.msra.mxu0 0.0
        %355 = vmatprep.subr.mxu0 0.0
        %356 = vmatpush1.msra.mxu0 0.0
        %357 = vmatprep.subr.mxu0 0.0
        %358 = vmatpush1.msra.mxu0 0.0
        %359 = vmatprep.subr.mxu0 0.0
        %360 = vmatpush1.msra.mxu0 0.0
        %361 = vmatprep.subr.mxu0 0.0
        %362 = vmatpush1.msra.mxu0 0.0
        %363 = vmatprep.subr.mxu0 0.0
        %364 = vmatpush1.msra.mxu0 0.0
        %365 = vmatprep.subr.mxu0 0.0
        %366 = vmatpush1.msra.mxu0 0.0
        %367 = vmatprep.subr.mxu0 0.0
        %368 = vmatpush1.msra.mxu0 0.0
        %369 = vmatprep.subr.mxu0 0.0
        %370 = vmatpush1.msra.mxu0 0.0
        %371 = vmatprep.subr.mxu0 0.0
        %372 = vmatpush1.msra.mxu0 0.0
        %373 = vmatprep.subr.mxu0 0.0
        %374 = vmatpush1.msra.mxu0 0.0
        %375 = vmatprep.subr.mxu0 0.0
        %376 = vmatpush1.msra.mxu0 0.0
        %377 = vmatprep.subr.mxu0 0.0
        %378 = vmatpush1.msra.mxu0 0.0
        %379 = vmatprep.subr.mxu0 0.0
        %380 = vmatpush1.msra.mxu0 0.0
        %381 = vmatprep.subr.mxu0 0.0
        %382 = vmatpush1.msra.mxu0 0.0
        %383 = vmatprep.subr.mxu0 0.0
        %384 = vmatpush1.msra.mxu0 0.0
        %385 = vmatprep.subr.mxu0 0.0
        %386 = vmatpush1.msra.mxu0 0.0
        %387 = vmatprep.subr.mxu0 0.0
        %388 = vmatpush1.msra.mxu0 0.0
        %389 = vmatprep.subr.mxu0 0.0
        %390 = vmatpush1.msra.mxu0 0.0
        %391 = vmatprep.subr.mxu0 0.0
        %392 = vmatpush1.msra.mxu0 0.0
        %393 = vmatprep.subr.mxu0 0.0
        %394 = vmatpush1.msra.mxu0 0.0
        %395 = vmatprep.subr.mxu0 0.0
        %396 = vmatpush1.msra.mxu0 0.0
        %397 = vmatprep.subr.mxu0 0.0
        %398 = vmatpush1.msra.mxu0 0.0
        %399 = vmatprep.mubr.f32.mxu0 0.0
        %400 = vmatmul.mubr.f32.gmra.mrb[0].mxu0 %v329
        %v401 = vpop.f32.mrb[0].mxu0
        %v402 = vadd.f32 0.0, %v401
        %v403 = vpop.f32.mrb[0].mxu0
        %404 = vdwg.mxu0
        %v405 = vld [vmem:[%s254] sm:$0xff]
        %v406 = vld [vmem:[%s254 + $0x8] sm:$0xf]
        %v407 = vld [vmem:[%s254 + $0x2] sm:$0xff]
        %v408 = vld [vmem:[%s254 + $0xa] sm:$0xf]
        %v410 = vrot.slane %v263, 4
        %vm411 = vcmask 31744
        %v413 = vsel %vm411, %v407, 0
        %v416 = vsel %vm411, %v408, 0
        %v418 = vsel %vm331, %v410, 0
        %420 = vmatprep.subr.mxu0 0.0
        %421 = vmatpush1.msra.mxu0 %v418
        %422 = vmatprep.subr.mxu0 0.0
        %423 = vmatpush1.msra.mxu0 0.0
        %424 = vmatprep.subr.mxu0 0.0
        %425 = vmatpush1.msra.mxu0 0.0
        %426 = vmatprep.subr.mxu0 0.0
        %427 = vmatpush1.msra.mxu0 0.0
        %428 = vmatprep.subr.mxu0 0.0
        %429 = vmatpush1.msra.mxu0 0.0
        %430 = vmatprep.subr.mxu0 0.0
        %431 = vmatpush1.msra.mxu0 0.0
        %432 = vmatprep.subr.mxu0 0.0
        %433 = vmatpush1.msra.mxu0 0.0
        %434 = vmatprep.subr.mxu0 0.0
        %435 = vmatpush1.msra.mxu0 0.0
        %436 = vmatprep.subr.mxu0 0.0
        %437 = vmatpush1.msra.mxu0 0.0
        %438 = vmatprep.subr.mxu0 0.0
        %439 = vmatpush1.msra.mxu0 0.0
        %440 = vmatprep.subr.mxu0 0.0
        %441 = vmatpush1.msra.mxu0 0.0
        %442 = vmatprep.subr.mxu0 0.0
        %443 = vmatpush1.msra.mxu0 0.0
        %444 = vmatprep.subr.mxu0 0.0
        %445 = vmatpush1.msra.mxu0 0.0
        %446 = vmatprep.subr.mxu0 0.0
        %447 = vmatpush1.msra.mxu0 0.0
        %448 = vmatprep.subr.mxu0 0.0
        %449 = vmatpush1.msra.mxu0 0.0
        %450 = vmatprep.subr.mxu0 0.0
        %451 = vmatpush1.msra.mxu0 0.0
        %452 = vmatprep.subr.mxu0 0.0
        %453 = vmatpush1.msra.mxu0 0.0
        %454 = vmatprep.subr.mxu0 0.0
        %455 = vmatpush1.msra.mxu0 0.0
        %456 = vmatprep.subr.mxu0 0.0
        %457 = vmatpush1.msra.mxu0 0.0
        %458 = vmatprep.subr.mxu0 0.0
        %459 = vmatpush1.msra.mxu0 0.0
        %460 = vmatprep.subr.mxu0 0.0
        %461 = vmatpush1.msra.mxu0 0.0
        %462 = vmatprep.subr.mxu0 0.0
        %463 = vmatpush1.msra.mxu0 0.0
        %464 = vmatprep.subr.mxu0 0.0
        %465 = vmatpush1.msra.mxu0 0.0
        %466 = vmatprep.subr.mxu0 0.0
        %467 = vmatpush1.msra.mxu0 0.0
        %468 = vmatprep.subr.mxu0 0.0
        %469 = vmatpush1.msra.mxu0 0.0
        %470 = vmatprep.subr.mxu0 0.0
        %471 = vmatpush1.msra.mxu0 0.0
        %472 = vmatprep.subr.mxu0 0.0
        %473 = vmatpush1.msra.mxu0 0.0
        %474 = vmatprep.subr.mxu0 0.0
        %475 = vmatpush1.msra.mxu0 0.0
        %476 = vmatprep.subr.mxu0 0.0
        %477 = vmatpush1.msra.mxu0 0.0
        %478 = vmatprep.subr.mxu0 0.0
        %479 = vmatpush1.msra.mxu0 0.0
        %480 = vmatprep.subr.mxu0 0.0
        %481 = vmatpush1.msra.mxu0 0.0
        %482 = vmatprep.subr.mxu0 0.0
        %483 = vmatpush1.msra.mxu0 0.0
        %484 = vmatprep.mubr.f32.mxu0 0.0
        %485 = vmatmul.mubr.f32.gmra.mrb[0].mxu0 %v413
        %v486 = vpop.f32.mrb[0].mxu0
        %v487 = vadd.f32 0.0, %v486
        %v488 = vpop.f32.mrb[0].mxu0
        %489 = vmatprep.mubr.f32.mxu0 0.0
        %490 = vmatmul.mubr.f32.gmra.mrb[0].mxu0 %v416
        %v491 = vpop.f32.mrb[0].mxu0
        %v492 = vadd.f32 0.0, %v491
        %v493 = vpop.f32.mrb[0].mxu0
        %494 = vdwg.mxu0
        %v496 = vsel %vm411, %v405, 0
        %v499 = vsel %vm411, %v406, 0
        %v501 = vsel %vm331, %v263, 0
        %503 = vmatprep.subr.mxu0 0.0
        %504 = vmatpush1.msra.mxu0 %v501
        %505 = vmatprep.subr.mxu0 0.0
        %506 = vmatpush1.msra.mxu0 0.0
        %507 = vmatprep.subr.mxu0 0.0
        %508 = vmatpush1.msra.mxu0 0.0
        %509 = vmatprep.subr.mxu0 0.0
        %510 = vmatpush1.msra.mxu0 0.0
        %511 = vmatprep.subr.mxu0 0.0
        %512 = vmatpush1.msra.mxu0 0.0
        %513 = vmatprep.subr.mxu0 0.0
        %514 = vmatpush1.msra.mxu0 0.0
        %515 = vmatprep.subr.mxu0 0.0
        %516 = vmatpush1.msra.mxu0 0.0
        %517 = vmatprep.subr.mxu0 0.0
        %518 = vmatpush1.msra.mxu0 0.0
        %519 = vmatprep.subr.mxu0 0.0
        %520 = vmatpush1.msra.mxu0 0.0
        %521 = vmatprep.subr.mxu0 0.0
        %522 = vmatpush1.msra.mxu0 0.0
        %523 = vmatprep.subr.mxu0 0.0
        %524 = vmatpush1.msra.mxu0 0.0
        %525 = vmatprep.subr.mxu0 0.0
        %526 = vmatpush1.msra.mxu0 0.0
        %527 = vmatprep.subr.mxu0 0.0
        %528 = vmatpush1.msra.mxu0 0.0
        %529 = vmatprep.subr.mxu0 0.0
        %530 = vmatpush1.msra.mxu0 0.0
        %531 = vmatprep.subr.mxu0 0.0
        %532 = vmatpush1.msra.mxu0 0.0
        %533 = vmatprep.subr.mxu0 0.0
        %534 = vmatpush1.msra.mxu0 0.0
        %535 = vmatprep.subr.mxu0 0.0
        %536 = vmatpush1.msra.mxu0 0.0
        %537 = vmatprep.subr.mxu0 0.0
        %538 = vmatpush1.msra.mxu0 0.0
        %539 = vmatprep.subr.mxu0 0.0
        %540 = vmatpush1.msra.mxu0 0.0
        %541 = vmatprep.subr.mxu0 0.0
        %542 = vmatpush1.msra.mxu0 0.0
        %543 = vmatprep.subr.mxu0 0.0
        %544 = vmatpush1.msra.mxu0 0.0
        %545 = vmatprep.subr.mxu0 0.0
        %546 = vmatpush1.msra.mxu0 0.0
        %547 = vmatprep.subr.mxu0 0.0
        %548 = vmatpush1.msra.mxu0 0.0
        %549 = vmatprep.subr.mxu0 0.0
        %550 = vmatpush1.msra.mxu0 0.0
        %551 = vmatprep.subr.mxu0 0.0
        %552 = vmatpush1.msra.mxu0 0.0
        %553 = vmatprep.subr.mxu0 0.0
        %554 = vmatpush1.msra.mxu0 0.0
        %555 = vmatprep.subr.mxu0 0.0
        %556 = vmatpush1.msra.mxu0 0.0
        %557 = vmatprep.subr.mxu0 0.0
        %558 = vmatpush1.msra.mxu0 0.0
        %559 = vmatprep.subr.mxu0 0.0
        %560 = vmatpush1.msra.mxu0 0.0
        %561 = vmatprep.subr.mxu0 0.0
        %562 = vmatpush1.msra.mxu0 0.0
        %563 = vmatprep.subr.mxu0 0.0
        %564 = vmatpush1.msra.mxu0 0.0
        %565 = vmatprep.subr.mxu0 0.0
        %566 = vmatpush1.msra.mxu0 0.0
        %567 = vmatprep.mubr.f32.mxu0 0.0
        %568 = vmatmul.mubr.f32.gmra.mrb[0].mxu0 %v496
        %v569 = vpop.f32.mrb[0].mxu0
        %v570 = vadd.f32 %v487, %v569
        %v571 = vpop.f32.mrb[0].mxu0
        %572 = vmatprep.mubr.f32.mxu0 0.0
        %573 = vmatmul.mubr.f32.gmra.mrb[0].mxu0 %v499
        %v574 = vpop.f32.mrb[0].mxu0
        %v575 = vadd.f32 %v492, %v574
        %v576 = vpop.f32.mrb[0].mxu0
        %577 = vdwg.mxu0
        %v578 = vld [vmem:[%s254 + $0x4] sm:$0xff]
        %v579 = vld [vmem:[%s254 + $0xc] sm:$0xf]
        %v581 = vsel %vm411, %v578, 0
        %v584 = vsel %vm411, %v579, 0
        %586 = vmatprep.subr.mxu0 0.0
        %587 = vmatpush1.msra.mxu0 %v333
        %588 = vmatprep.subr.mxu0 0.0
        %589 = vmatpush1.msra.mxu0 0.0
        %590 = vmatprep.subr.mxu0 0.0
        %591 = vmatpush1.msra.mxu0 0.0
        %592 = vmatprep.subr.mxu0 0.0
        %593 = vmatpush1.msra.mxu0 0.0
        %594 = vmatprep.subr.mxu0 0.0
        %595 = vmatpush1.msra.mxu0 0.0
        %596 = vmatprep.subr.mxu0 0.0
        %597 = vmatpush1.msra.mxu0 0.0
        %598 = vmatprep.subr.mxu0 0.0
        %599 = vmatpush1.msra.mxu0 0.0
        %600 = vmatprep.subr.mxu0 0.0
        %601 = vmatpush1.msra.mxu0 0.0
        %602 = vmatprep.subr.mxu0 0.0
        %603 = vmatpush1.msra.mxu0 0.0
        %604 = vmatprep.subr.mxu0 0.0
        %605 = vmatpush1.msra.mxu0 0.0
        %606 = vmatprep.subr.mxu0 0.0
        %607 = vmatpush1.msra.mxu0 0.0
        %608 = vmatprep.subr.mxu0 0.0
        %609 = vmatpush1.msra.mxu0 0.0
        %610 = vmatprep.subr.mxu0 0.0
        %611 = vmatpush1.msra.mxu0 0.0
        %612 = vmatprep.subr.mxu0 0.0
        %613 = vmatpush1.msra.mxu0 0.0
        %614 = vmatprep.subr.mxu0 0.0
        %615 = vmatpush1.msra.mxu0 0.0
        %616 = vmatprep.subr.mxu0 0.0
        %617 = vmatpush1.msra.mxu0 0.0
        %618 = vmatprep.subr.mxu0 0.0
        %619 = vmatpush1.msra.mxu0 0.0
        %620 = vmatprep.subr.mxu0 0.0
        %621 = vmatpush1.msra.mxu0 0.0
        %622 = vmatprep.subr.mxu0 0.0
        %623 = vmatpush1.msra.mxu0 0.0
        %624 = vmatprep.subr.mxu0 0.0
        %625 = vmatpush1.msra.mxu0 0.0
        %626 = vmatprep.subr.mxu0 0.0
        %627 = vmatpush1.msra.mxu0 0.0
        %628 = vmatprep.subr.mxu0 0.0
        %629 = vmatpush1.msra.mxu0 0.0
        %630 = vmatprep.subr.mxu0 0.0
        %631 = vmatpush1.msra.mxu0 0.0
        %632 = vmatprep.subr.mxu0 0.0
        %633 = vmatpush1.msra.mxu0 0.0
        %634 = vmatprep.subr.mxu0 0.0
        %635 = vmatpush1.msra.mxu0 0.0
        %636 = vmatprep.subr.mxu0 0.0
        %637 = vmatpush1.msra.mxu0 0.0
        %638 = vmatprep.subr.mxu0 0.0
        %639 = vmatpush1.msra.mxu0 0.0
        %640 = vmatprep.subr.mxu0 0.0
        %641 = vmatpush1.msra.mxu0 0.0
        %642 = vmatprep.subr.mxu0 0.0
        %643 = vmatpush1.msra.mxu0 0.0
        %644 = vmatprep.subr.mxu0 0.0
        %645 = vmatpush1.msra.mxu0 0.0
        %646 = vmatprep.subr.mxu0 0.0
        %647 = vmatpush1.msra.mxu0 0.0
        %648 = vmatprep.subr.mxu0 0.0
        %649 = vmatpush1.msra.mxu0 0.0
        %650 = vmatprep.mubr.f32.mxu0 0.0
        %651 = vmatmul.mubr.f32.gmra.mrb[0].mxu0 %v581
        %v652 = vpop.f32.mrb[0].mxu0
        %v653 = vadd.f32 0.0, %v652
        %v654 = vpop.f32.mrb[0].mxu0
        %655 = vmatprep.mubr.f32.mxu0 0.0
        %656 = vmatmul.mubr.f32.gmra.mrb[0].mxu0 %v584
        %v657 = vpop.f32.mrb[0].mxu0
        %v658 = vadd.f32 0.0, %v657
        %v659 = vpop.f32.mrb[0].mxu0
        %660 = vdwg.mxu0
        %v661 = vadd.f32 %v570, %v653
        %v662 = vadd.f32 %v575, %v658
        %v663 = vsub.f32 1.0, %v288
        %v665 = vlaneseq
        %v666 = vshrl.u32 %v665, 7
        %v667 = vsub.s32 0, %v666
        %v668 = vrot.slane %v663, %v667
        %v670 = vmul.f32 %v661, %v668
        %v671 = vmul.f32 %v662, %v668
        %672 = vst.msk [vmem:[#allocation4] sm:$0xff] %vm267, %v670
        %673 = vst.msk [vmem:[#allocation4 + $0x8] sm:$0xf] %vm269, %v671
        %s674 = smul.u32 %s26, 6
        %s675 = ssub.s32 16, %s674
        loop: start=0, step=1, limit=6
        $region41: #{tpu_custom_call.1} parent=35 // loop_pre_header
          _
        $region42: #{tpu_custom_call.1} parent=35 // loop_header
          %s677 = sphi 0, %s681
          %p678 = scmp.ge.s32.totalorder %s677, 6
        $region43: #{tpu_custom_call.1} parent=35 // loop_header_branch
          %680 = sbr.rel (%p678) target = $region47
        $region44: #{tpu_custom_call.1} parent=35 // loop_body
          %v682 = vld [vmem:[#allocation3] sm:$0x3]
          %v684 = vsel %vm267, %v682, 0
          %686 = vmatprep.subr.mxu0 0.0
          %687 = vmatpush1.msra.mxu0 %v402
          %688 = vmatprep.subr.mxu0 0.0
          %689 = vmatpush1.msra.mxu0 0.0
          %690 = vmatprep.subr.mxu0 0.0
          %691 = vmatpush1.msra.mxu0 0.0
          %692 = vmatprep.subr.mxu0 0.0
          %693 = vmatpush1.msra.mxu0 0.0
          %694 = vmatprep.subr.mxu0 0.0
          %695 = vmatpush1.msra.mxu0 0.0
          %696 = vmatprep.subr.mxu0 0.0
          %697 = vmatpush1.msra.mxu0 0.0
          %698 = vmatprep.subr.mxu0 0.0
          %699 = vmatpush1.msra.mxu0 0.0
          %700 = vmatprep.subr.mxu0 0.0
          %701 = vmatpush1.msra.mxu0 0.0
          %702 = vmatprep.subr.mxu0 0.0
          %703 = vmatpush1.msra.mxu0 0.0
          %704 = vmatprep.subr.mxu0 0.0
          %705 = vmatpush1.msra.mxu0 0.0
          %706 = vmatprep.subr.mxu0 0.0
          %707 = vmatpush1.msra.mxu0 0.0
          %708 = vmatprep.subr.mxu0 0.0
          %709 = vmatpush1.msra.mxu0 0.0
          %710 = vmatprep.subr.mxu0 0.0
          %711 = vmatpush1.msra.mxu0 0.0
          %712 = vmatprep.subr.mxu0 0.0
          %713 = vmatpush1.msra.mxu0 0.0
          %714 = vmatprep.subr.mxu0 0.0
          %715 = vmatpush1.msra.mxu0 0.0
          %716 = vmatprep.subr.mxu0 0.0
          %717 = vmatpush1.msra.mxu0 0.0
          %718 = vmatprep.subr.mxu0 0.0
          %719 = vmatpush1.msra.mxu0 0.0
          %720 = vmatprep.subr.mxu0 0.0
          %721 = vmatpush1.msra.mxu0 0.0
          %722 = vmatprep.subr.mxu0 0.0
          %723 = vmatpush1.msra.mxu0 0.0
          %724 = vmatprep.subr.mxu0 0.0
          %725 = vmatpush1.msra.mxu0 0.0
          %726 = vmatprep.subr.mxu0 0.0
          %727 = vmatpush1.msra.mxu0 0.0
          %728 = vmatprep.subr.mxu0 0.0
          %729 = vmatpush1.msra.mxu0 0.0
          %730 = vmatprep.subr.mxu0 0.0
          %731 = vmatpush1.msra.mxu0 0.0
          %732 = vmatprep.subr.mxu0 0.0
          %733 = vmatpush1.msra.mxu0 0.0
          %734 = vmatprep.subr.mxu0 0.0
          %735 = vmatpush1.msra.mxu0 0.0
          %736 = vmatprep.subr.mxu0 0.0
          %737 = vmatpush1.msra.mxu0 0.0
          %738 = vmatprep.subr.mxu0 0.0
          %739 = vmatpush1.msra.mxu0 0.0
          %740 = vmatprep.subr.mxu0 0.0
          %741 = vmatpush1.msra.mxu0 0.0
          %742 = vmatprep.subr.mxu0 0.0
          %743 = vmatpush1.msra.mxu0 0.0
          %744 = vmatprep.subr.mxu0 0.0
          %745 = vmatpush1.msra.mxu0 0.0
          %746 = vmatprep.subr.mxu0 0.0
          %747 = vmatpush1.msra.mxu0 0.0
          %748 = vmatprep.subr.mxu0 0.0
          %749 = vmatpush1.msra.mxu0 0.0
          %750 = vmatprep.mubr.f32.mxu0 0.0
          %751 = vmatmul.mubr.f32.gmra.mrb[0].mxu0 %v684
          %v752 = vpop.f32.mrb[0].mxu0
          %v753 = vadd.f32 0.0, %v752
          %v754 = vpop.f32.mrb[0].mxu0
          %755 = vdwg.mxu0
          %s756 = smul.u32 %s677, 2
          %s757 = scalar_lea.vmem [#allocation4], %s756
          %v758 = vld [vmem:[%s757] sm:$0x3]
          %v759 = vld [vmem:[#allocation2] sm:$0x3]
          %v760 = vsub.f32 %v759, %v753
          %v761 = vmul.f32 %v760, %v293
          %v762 = vadd.f32 %v761, %v758
          %v763 = vmul.f32 %v762, %v280
          %v764 = vsub.f32 %v763, %v286
          %vm765 = vcmp.gt.f32.partialorder %v764, 0.0
          %v766 = vsel %vm765, 1, 0
          %v767 = vcvt.s32.f32 %v766
          %vm768 = vcmask 58368
          %769 = vst.msk [vmem:[#allocation2] sm:$0x3] %vm768, %v762
          %770 = vst.msk [vmem:[#allocation3] sm:$0x3] %vm768, %v767
          %v771 = vpack.c.bf16 %v767, %v767
          %s772 = scalar_lea.vmem %s243, %s677 [#allocation6]
          %vm773 = vcmask 57344
          %774 = vst.msk [vmem:[%s772] sm:$0x1] %vm773, %v771
          %p775 = scmp.lt.s32.totalorder %s677, %s675
          %s776 = scalar_select %p775, 1, 0
          %s777 = scvt.s32.f32 %s776
          %v778 = vld [vmem:[#allocation5] sm:$0x3]
          %v779 = vstv %s777
          %v780 = vmul.f32 %v767, %v779
          %v781 = vadd.f32 %v778, %v780
          %782 = vst.msk [vmem:[#allocation5] sm:$0x3] %vm768, %v781
        $region45: #{tpu_custom_call.1} parent=35 // loop_footer
          %s681 = sadd.s32 1, %s677
        $region46: #{tpu_custom_call.1} parent=35 // loop_footer_branch
          %676 = sbr.rel target = $region42
        $region47: #{tpu_custom_call.1} parent=35 // loop_exit
          _
        %p783 = scmp.eq.s32.totalorder %s26, 2
        // Predicated region
        $region48: #{tpu_custom_call.1} parent=35 // pred_check
          %p784 = pneg %p783
        $region49: #{tpu_custom_call.1} parent=35 // pred_check_branch
          %786 = sbr.rel (%p784) target = $region51
        $region50: #{tpu_custom_call.1} parent=35 // pred_region
          %v787 = vld [vmem:[#allocation5] sm:$0x3]
          %vm788 = vcmask 58368
          %v789 = vsel %vm788, %v787, 0.0
          %790 = vadd.xlane.f32.xlu0 %v789
          %v791 = vpop.xlane.xlu0 %790
          %v792 = vrot.slane %v791, 4
          %v793 = vadd.f32 %v791, %v792
          %v794 = vrot.slane %v793, 2
          %v795 = vadd.f32 %v793, %v794
          %v796 = vrot.slane %v795, 1
          %v797 = vadd.f32 %v795, %v796
          %s798 = vtos %v797
          %v799 = vstv %s798
          %vm800 = vcmask 0
          %801 = vst.msk [vmem:[#allocation8] sm:$0x1] %vm800, %v799
        $region51: #{tpu_custom_call.1} parent=35 // pred_fallthru
          _
        %s802 = sand.u32 %s134, 1
        %s803 = scalar_lea.sflag [#allocation7], %s802
        %s804 = sand.u32 %s134, 1
        %s805 = smul.addr %s804, 6
        %s806 = scalar_lea.vmem [#allocation6], %s805
        // Predicated region
        $region52: #{tpu_custom_call.1} parent=35 // pred_check
          %p807 = pneg %p144
        $region53: #{tpu_custom_call.1} parent=35 // pred_check_branch
          %809 = sbr.rel (%p807) target = $region55
        $region54: #{tpu_custom_call.1} parent=35 // pred_region
          %s811 = ssub.s32 96, 96
          %812 = vsyncadd %s803, %s811
          %s813 = smul.addr %s26, 6
          %s814 = sadd.s32 %s25, %s813
          %s815 = smul.addr %s814, 16
          %s816 = scalar_lea.hbm %s4, %s815
          %s817 = sshll.u32 %s806, 4
          %s818 = int_to_ptr.vmem [resolvable:$true] %s817
          %823 = dma.vmem_to_hbm [thread:$0]  %s818, 96, %s816, %s803, 16, 16, 1
        $region55: #{tpu_custom_call.1} parent=35 // pred_fallthru
          _
        // Predicated region
        $region56: #{tpu_custom_call.1} parent=35 // pred_check
          %p824 = pneg %p170
        $region57: #{tpu_custom_call.1} parent=35 // pred_check_branch
          %826 = sbr.rel (%p824) target = $region59
        $region58: #{tpu_custom_call.1} parent=35 // pred_region
          %s828 = ssub.s32 16, 16
          %829 = vsyncadd [#allocation9], %s828
          %s830 = smul.addr %s25, 16
          %s831 = scalar_lea.hbm %s5, %s830
          %s833 = sshll.u32 [#allocation8], 4
          %s834 = int_to_ptr.vmem [resolvable:$true] %s833
          %836 = dma.vmem_to_hbm [thread:$0]  %s834, 16, %s831, [#allocation9]
        $region59: #{tpu_custom_call.1} parent=35 // pred_fallthru
          _
        // Predicated region
        $region60: #{tpu_custom_call.1} parent=35 // pred_check
          %p837 = pneg %p170
        $region61: #{tpu_custom_call.1} parent=35 // pred_check_branch
          %839 = sbr.rel (%p837) target = $region63
        $region62: #{tpu_custom_call.1} parent=35 // pred_region
          %840 = dma.done [#allocation9], 16
        $region63: #{tpu_custom_call.1} parent=35 // pred_fallthru
          _
      $region36: #{tpu_custom_call.1} parent=5 // pred_fallthru
        _
      %p841 = scmp.le.s32.totalorder 2, %s16
      // Predicated region
      $region64: #{tpu_custom_call.1} parent=5 // pred_check
        %p842 = pneg %p841
      $region65: #{tpu_custom_call.1} parent=5 // pred_check_branch
        %844 = sbr.rel (%p842) target = $region67
      $region66: #{tpu_custom_call.1} parent=5 // pred_region
        %s845 = ssub.s32 %s16, 2
        // Predicated region
        $region68: #{tpu_custom_call.1} parent=66 // pred_check
          %p846 = pneg %p150
        $region69: #{tpu_custom_call.1} parent=66 // pred_check_branch
          %848 = sbr.rel (%p846) target = $region71
        $region70: #{tpu_custom_call.1} parent=66 // pred_region
          %s849 = sand.u32 %s135, 1
          %s850 = scalar_lea.sflag [#allocation7], %s849
          %s851 = sand.u32 %s135, 1
          %s852 = smul.addr %s851, 6
          %s853 = scalar_lea.vmem [#allocation6], %s852
          %854 = dma.done %s850, 96
        $region71: #{tpu_custom_call.1} parent=66 // pred_fallthru
          _
      $region67: #{tpu_custom_call.1} parent=5 // pred_fallthru
        _
    $region6: #{tpu_custom_call.1} parent=1 // loop_footer
      %s20 = sadd.s32 1, %s16
    $region7: #{tpu_custom_call.1} parent=1 // loop_footer_branch
      %15 = sbr.rel target = $region3
    $region8: #{tpu_custom_call.1} parent=1 // loop_exit
      _
    %855 = vsyncpa [#allocation7], 1
    %s856 = scalar_lea.sflag [#allocation7], 1
    %857 = vsyncpa %s856, 1
    %858 = vsyncpa [#allocation9], 1

</llo_original>
